<compile_context>
chip_gen: v6e
topology: v6e:2x2x1
jax: 0.10.0
libtpu: 0.0.40
codegen_flags: <defaults>
</compile_context>

<pallas_src>
import jax
import jax.numpy as jnp
from jax.experimental import pallas as pl
from jax.experimental.pallas import tpu as pltpu


def _copy_kernel(x_ref, o_ref):
    # Identity forward: straight VMEM tile copy.
    o_ref[...] = x_ref[...]


def _copy_whole(x2d):
    """Single-block copy: whole array as one VMEM block (grid=())."""
    return pl.pallas_call(
        _copy_kernel,
        out_shape=jax.ShapeDtypeStruct(x2d.shape, x2d.dtype),
        input_output_aliases={0: 0},
    )(x2d)


def _copy_tiled(x2d, tile_r, tile_c):
    """Tiled copy; ragged edge blocks are handled by the grid (no padding)."""
    R, C = x2d.shape
    grid = (pl.cdiv(R, tile_r), pl.cdiv(C, tile_c))
    return pl.pallas_call(
        _copy_kernel,
        out_shape=jax.ShapeDtypeStruct((R, C), x2d.dtype),
        grid_spec=pltpu.PrefetchScalarGridSpec(
            num_scalar_prefetch=0,
            grid=grid,
            in_specs=[pl.BlockSpec((tile_r, tile_c), lambda i, j: (i, j))],
            out_specs=pl.BlockSpec((tile_r, tile_c), lambda i, j: (i, j)),
        ),
        compiler_params=pltpu.CompilerParams(
            dimension_semantics=("parallel", "parallel"),
        ),
        input_output_aliases={0: 0},
    )(x2d)


_SINGLE_BLOCK_BYTES = 2 << 20   # <= 2 MiB: one un-gridded VMEM block
_MAX_TILE_BYTES = 2 << 20       # per-tile cap; double-buffered in+out stays ~8 MiB


def _lane_dense_shape(n):
    """Pick (R, C) with C a large multiple of 128 dividing n (lane-dense slab)."""
    candidates = [c for c in (4096, 2048, 1024, 512, 256, 128) if n % c == 0]
    if not candidates:
        return None
    for c in candidates:            # prefer wide C with >= 8 rows (full vregs)
        if n // c >= 8:
            return n // c, c
    c = candidates[-1]              # tiny array: just keep 128 lanes
    return n // c, c


@jax.jit
def pallas_identity(x):
    """Pallas equivalent of TestModule.forward on 'x' (explicit copy kernel)."""
    orig_shape = x.shape
    n = x.size
    if n == 0:
        return x
    itemsize = jnp.dtype(x.dtype).itemsize
    sublane = 8 * max(1, 4 // itemsize)   # 8 for f32, 16 for bf16, 32 for int8
    flat = x.reshape(-1)

    shp = _lane_dense_shape(n)
    if shp is None:
        # n not a multiple of 128: use a flat (1, n) slab.
        x2d = flat.reshape(1, n)
        if n * itemsize <= _SINGLE_BLOCK_BYTES:
            y2d = _copy_whole(x2d)
        else:
            tile_c = (512 * 1024) // itemsize      # 512 KiB tiles, multiple of 128
            y2d = _copy_tiled(x2d, 1, tile_c)
        return y2d.reshape(orig_shape)

    R, C = shp
    x2d = flat.reshape(R, C)
    if R * C * itemsize <= _SINGLE_BLOCK_BYTES:
        y2d = _copy_whole(x2d)
    else:
        tile_r = min(R, _MAX_TILE_BYTES // (C * itemsize))
        tile_r = max(sublane, (tile_r // sublane) * sublane)
        y2d = _copy_tiled(x2d, tile_r, C)
    return y2d.reshape(orig_shape)


def test_module_forward(dict_input):
    """Pallas equivalent of TestModule.forward: returns dict_input['x']."""
    # TODO(synk): the module is a pure identity; returning x directly would be
    # free — the explicit copy kernel is kept to provide a real Pallas path.
    return pallas_identity(dict_input["x"])


if __name__ == "__main__":
    key = jax.random.PRNGKey(0)
    # Small NCHW-like tensor consistent with a generic dict input.
    x = jax.random.normal(key, (2, 4, 16, 16), dtype=jnp.float32)
    dict_input = {"x": x}
    out = test_module_forward(dict_input)
    out = jax.block_until_ready(out)
    assert out.shape == x.shape and out.dtype == x.dtype
    assert bool(jnp.all(out == x))

    # Also exercise the multi-block (tiled) path at a modest size.
    x2 = jax.random.normal(jax.random.PRNGKey(0), (4, 256, 1024), dtype=jnp.float32)
    out2 = jax.block_until_ready(test_module_forward({"x": x2}))
    assert out2.shape == x2.shape and out2.dtype == x2.dtype
    assert bool(jnp.all(out2 == x2))

    print("KERNEL_OK")
</pallas_src>

<mosaic_0001>
module attributes {stable_mosaic.version = 11 : i64} {
  func.func @_copy_kernel(%arg0: memref<8x256xf32, #tpu.memory_space<vmem>>, %arg1: memref<8x256xf32, #tpu.memory_space<vmem>>) attributes {dimension_semantics = [], scalar_prefetch = 0 : i64, scratch_operands = 0 : i64, tpu.core_type = #tpu.core_type<tc>} {
    %c0 = arith.constant 0 : index
    %c0_0 = arith.constant 0 : index
    %0 = vector.load %arg0[%c0, %c0_0] : memref<8x256xf32, #tpu.memory_space<vmem>>, vector<8x256xf32>
    %c0_1 = arith.constant 0 : index
    %c0_2 = arith.constant 0 : index
    %1 = vector.load %arg1[%c0_1, %c0_2] : memref<8x256xf32, #tpu.memory_space<vmem>>, vector<8x256xf32>
    tpu.vector_store %arg1[%c0_1, %c0_2], %0 {strides = array<i32>} : memref<8x256xf32, #tpu.memory_space<vmem>>, vector<8x256xf32>,
    return
  }
}

</mosaic_0001>

<llo_original>
// kernel: pallas_identity.1
$region0: #{pallas_identity.1}
  #allocation0 [shape = 'u32[]', space=smem, size = 0x4, offset = 0x4, fixed_abs, tag = 'smem constant byte address 0x4 - core index']
  #allocation1 [shape = 'u32[144,128]{1,0:T(1,128)}', space=vmem, size = 0x12000, scoped, tag = 'internal scratch']
  %s0 = inlined_call_operand.vmem [shape: f32[8,256], index: 0, kind: input, shape index: {}, may-alias: {0,1}]
  %s1 = inlined_call_operand.vmem [shape: f32[8,256], index: 1, kind: output, shape index: {}, may-alias: {0,1}]
  %s2 = sld [smem:[#allocation0]]
  $region14: #{pallas_identity.1} parent=0
    _
  %s4 = ssub.s32 1, %s2
  %s5 = scalar_select 0, %s4, %s2
  // Predicated region
  $region2: #{pallas_identity.1} parent=0 // pred_check
    _
  $region3: #{pallas_identity.1} parent=0 // pred_check_branch
    %7 = sbr.rel (0) target = $region5
  $region4: #{pallas_identity.1} parent=0 // pred_region
    _
  $region5: #{pallas_identity.1} parent=0 // pred_fallthru
    _
  %v8 = vld [vmem:[%s0] sm:$0xff]
  %v9 = vld [vmem:[%s0 + $0x8] sm:$0xff]
  %10 = vst [vmem:[%s1] sm:$0xff] %v8
  %11 = vst [vmem:[%s1 + $0x8] sm:$0xff] %v9
  // Predicated region
  $region6: #{pallas_identity.1} parent=0 // pred_check
    _
  $region7: #{pallas_identity.1} parent=0 // pred_check_branch
    %13 = sbr.rel (0) target = $region9
  $region8: #{pallas_identity.1} parent=0 // pred_region
    _
  $region9: #{pallas_identity.1} parent=0 // pred_fallthru
    _
  // Predicated region
  $region10: #{pallas_identity.1} parent=0 // pred_check
    _
  $region11: #{pallas_identity.1} parent=0 // pred_check_branch
    %15 = sbr.rel (0) target = $region13
  $region12: #{pallas_identity.1} parent=0 // pred_region
    _
  $region13: #{pallas_identity.1} parent=0 // pred_fallthru
    _

</llo_original>
